<compile_context>
chip_gen: v5e
topology: v5e:2x2
jax: 0.10.0
libtpu: 0.0.40
codegen_flags: <defaults>
</compile_context>

<pallas_src>
import math

import jax
import jax.numpy as jnp
from jax.experimental import pallas as pl
from jax.experimental.pallas import tpu as pltpu

_SUB = 8      # f32 sublane count
_LANE = 128   # lane count
_LOG2 = float(math.log(2.0))                    # bce(x=0, z=0) / bce(x=g, g=0)
_LOG1P_EXP_NEG1 = float(math.log1p(math.exp(-1.0)))   # bce(x=1, z=1)


def _sublane_multiple(itemsize):
    if itemsize >= 4:
        return _SUB
    return _SUB * (4 // itemsize)     # bf16 -> 16, int8/bool -> 32


def _choose_tw(HW, max_tw=4096, floor=2048):
    """Largest multiple of 128 dividing HW (<= max_tw, >= floor), else fallback."""
    if HW <= max_tw:
        return HW                      # full-width block is always legal
    t = (max_tw // _LANE) * _LANE
    while t >= floor:
        if HW % t == 0:
            return t
        t -= _LANE
    return max_tw                      # unavoidable column tail (rare)


def _choose_tiles(N, HW, itemsizes):
    """Pick (row_block, lane_block, n_row_blocks, n_lane_blocks)."""
    row_mult = max(_sublane_multiple(it) for it in itemsizes)
    tw = _choose_tw(HW)
    n_hw = pl.cdiv(HW, tw)

    target_bytes = 2 << 20             # ~2 MiB per input per grid step
    max_it = max(itemsizes)
    bn = target_bytes // max(1, tw * max_it)
    bn = max(row_mult, (bn // row_mult) * row_mult)

    rows_padded = pl.cdiv(N, row_mult) * row_mult
    # Guarantee >= 2 row blocks when possible so both v7x TensorCores get work.
    if rows_padded >= 2 * row_mult:
        half = max(row_mult, (rows_padded // 2 // row_mult) * row_mult)
        bn = min(bn, half)
    bn = min(bn, 512, rows_padded)

    # Re-balance so the split is as even as possible (e.g. 32/32/24, not 40/40/8).
    n_r = pl.cdiv(N, bn)
    bn = pl.cdiv(pl.cdiv(rows_padded, n_r), row_mult) * row_mult
    n_r = pl.cdiv(N, bn)
    return bn, tw, n_r, n_hw


def _make_fused_kernel(N, HW, bn, tw, assume_binary):
    need_row_mask = (N % bn) != 0
    need_col_mask = (HW % tw) != 0

    def kernel(p_ref, g_ref, mk_ref, out_b_ref, out_m_ref,
               npos_acc, bce_b_acc, mbce_b_acc, bce_m_acc, mbce_m_acc):
        r = pl.program_id(0)
        h = pl.program_id(1)

        @pl.when(h == 0)
        def _():
            npos_acc[...] = jnp.zeros_like(npos_acc)
            bce_b_acc[...] = jnp.zeros_like(bce_b_acc)
            mbce_b_acc[...] = jnp.zeros_like(mbce_b_acc)
            bce_m_acc[...] = jnp.zeros_like(bce_m_acc)
            mbce_m_acc[...] = jnp.zeros_like(mbce_m_acc)

        col_valid = None
        if need_col_mask:
            cols = jax.lax.broadcasted_iota(jnp.int32, (bn, tw), 1) + h * tw
            col_valid = cols < HW

        def accumulate(p, g, mk):
            edge = g > 0.5
            m = edge.astype(jnp.float32)
            # numerically-stable BCE-with-logits: max(x,0) - x*z + log1p(exp(-|x|))
            bce_b = jnp.maximum(p, 0.0) - p * g + jnp.log1p(jnp.exp(-jnp.abs(p)))
            if assume_binary:
                # gt, mask in {0,1}: x = select(mk, p, g);  bce(g, g) is a constant.
                const_g = jnp.where(edge, jnp.float32(_LOG1P_EXP_NEG1),
                                    jnp.float32(_LOG2))
                bce_m = jnp.where(mk > 0.5, bce_b, const_g)
            else:
                x = g + mk * (p - g)          # == p*mk + g*(1-mk)
                bce_m = (jnp.maximum(x, 0.0) - x * g
                         + jnp.log1p(jnp.exp(-jnp.abs(x))))
            if col_valid is not None:
                m = jnp.where(col_valid, m, 0.0)
                bce_b = jnp.where(col_valid, bce_b, 0.0)
                bce_m = jnp.where(col_valid, bce_m, 0.0)
            # per-row partial sums; weights applied once per row at finalize
            npos_acc[...] += jnp.sum(m, axis=-1, keepdims=True)
            bce_b_acc[...] += jnp.sum(bce_b, axis=-1, keepdims=True)
            mbce_b_acc[...] += jnp.sum(m * bce_b, axis=-1, keepdims=True)
            bce_m_acc[...] += jnp.sum(bce_m, axis=-1, keepdims=True)
            mbce_m_acc[...] += jnp.sum(m * bce_m, axis=-1, keepdims=True)

        p = p_ref[...].astype(jnp.float32)
        g = g_ref[...].astype(jnp.float32)
        mk = mk_ref[...].astype(jnp.float32)

        if need_row_mask:
            is_tail = r == pl.num_programs(0) - 1

            @pl.when(is_tail)
            def _():
                rows = jax.lax.broadcasted_iota(jnp.int32, (bn, tw), 0) + r * bn
                rv = rows < N
                # Zero garbage rows so exp/log1p stay finite; their partials are
                # cancelled again at finalize.
                accumulate(jnp.where(rv, p, 0.0),
                           jnp.where(rv, g, 0.0),
                           jnp.where(rv, mk, 0.0))

            @pl.when(jnp.logical_not(is_tail))
            def _():
                accumulate(p, g, mk)
        else:
            accumulate(p, g, mk)

        @pl.when(h == pl.num_programs(1) - 1)
        def _():
            total = jnp.float32(HW)
            npos = npos_acc[...]
            pos_w = npos / total
            neg_w = (total - npos) / total
            # PyTorch: weight = neg_w * edge_mask + pos_w * (1 - edge_mask)
            # => sum(weight*bce) = neg_w*sum(m*bce) + pos_w*(sum(bce)-sum(m*bce))
            row_b = neg_w * mbce_b_acc[...] + pos_w * (bce_b_acc[...] - mbce_b_acc[...])
            row_m = neg_w * mbce_m_acc[...] + pos_w * (bce_m_acc[...] - mbce_m_acc[...])
            if need_row_mask:
                rows = jax.lax.broadcasted_iota(jnp.int32, (bn, 1), 0) + r * bn
                rv = (rows < N).astype(jnp.float32)
                row_b = row_b * rv
                row_m = row_m * rv
            out_b_ref[...] = jnp.full(out_b_ref.shape, jnp.sum(row_b), jnp.float32)
            out_m_ref[...] = jnp.full(out_m_ref.shape, jnp.sum(row_m), jnp.float32)

    return kernel


def edge_loss_pair(preds2d, gt2d, mask2d, assume_binary=False):
    """Fused edgeLoss pair on [N, HW] slabs.

    Returns (mean weighted BCE(preds, gt),
             mean weighted BCE(preds*mask + gt*(1-mask), gt)).
    Inputs may be any dtype; they are cast to f32 in-kernel.
    """
    N, HW = preds2d.shape
    itemsizes = (jnp.dtype(preds2d.dtype).itemsize,
                 jnp.dtype(gt2d.dtype).itemsize,
                 jnp.dtype(mask2d.dtype).itemsize)
    bn, tw, n_r, n_hw = _choose_tiles(N, HW, itemsizes)

    in_spec = pl.BlockSpec((bn, tw), lambda r, h: (r, h))
    out_spec = pl.BlockSpec((1, _SUB, _LANE), lambda r, h: (r, 0, 0))
    out_shape = (jax.ShapeDtypeStruct((n_r, _SUB, _LANE), jnp.float32),
                 jax.ShapeDtypeStruct((n_r, _SUB, _LANE), jnp.float32))

    out_b, out_m = pl.pallas_call(
        _make_fused_kernel(N, HW, bn, tw, assume_binary),
        out_shape=out_shape,
        grid_spec=pltpu.PrefetchScalarGridSpec(
            num_scalar_prefetch=0,
            grid=(n_r, n_hw),                      # reduction axis (HW) last
            in_specs=[in_spec, in_spec, in_spec],
            out_specs=(out_spec, out_spec),
            scratch_shapes=[pltpu.VMEM((bn, 1), jnp.float32)] * 5,
        ),
        compiler_params=pltpu.CompilerParams(
            dimension_semantics=("parallel", "arbitrary"),
            vmem_limit_bytes=32 * 1024 * 1024),
    )(preds2d, gt2d, mask2d)

    denom = jnp.float32(N) * jnp.float32(HW)   # torch.mean over N*1*h*w elements
    base = jnp.sum(out_b[:, 0, 0]) / denom
    masked = jnp.sum(out_m[:, 0, 0]) / denom
    return base, masked


def edge_loss_forward(pred_edges, gt_edges, masks, assume_binary=False):
    """EdgeLoss.forward.

    pred_edges / gt_edges: lists of arrays with shape [B, T-1, 1, H, W]
    masks:                 array with shape        [B, T,   1, H, W]
    assume_binary: set True only if gt_edges and masks are strictly {0, 1}
                   (enables the collapsed second-BCE fast path).
    """
    h, w = pred_edges[0].shape[-2], pred_edges[0].shape[-1]
    masks_list = [masks[:, :-1, ...], masks[:, 1:, ...]]
    loss = jnp.float32(0.0)
    for i in range(len(pred_edges)):
        # reshape(-1, 1, h, w) with c == 1  <=>  flatten to (-1, h*w)
        p = pred_edges[i].reshape(-1, h * w)
        g = gt_edges[i].reshape(-1, h * w)
        mk = masks_list[i].reshape(-1, h * w)
        base, masked = edge_loss_pair(p, g, mk, assume_binary=assume_binary)
        loss = loss + base + 5.0 * masked
    return loss


# ---------------- pure-JAX reference (mirrors the PyTorch code) ----------------
def _edge_loss_ref_single(preds, edges):
    m = (edges > 0.5).astype(jnp.float32)
    _, c, hh, ww = m.shape
    num_pos = jnp.sum(m, axis=(1, 2, 3))
    num_neg = c * hh * ww - num_pos
    denom = num_pos + num_neg
    neg_w = (num_neg / denom)[:, None, None, None]
    pos_w = (num_pos / denom)[:, None, None, None]
    weight = neg_w * m + pos_w * (1.0 - m)
    x = preds.astype(jnp.float32)
    z = edges.astype(jnp.float32)
    losses = weight * (jnp.maximum(x, 0.0) - x * z + jnp.log1p(jnp.exp(-jnp.abs(x))))
    return jnp.mean(losses)


def edge_loss_forward_ref(pred_edges, gt_edges, masks):
    h, w = pred_edges[0].shape[-2], pred_edges[0].shape[-1]
    masks_list = [masks[:, :-1, ...], masks[:, 1:, ...]]
    loss = 0.0
    for i in range(len(pred_edges)):
        combined = pred_edges[i] * masks_list[i] + gt_edges[i] * (1.0 - masks_list[i])
        loss = (loss
                + _edge_loss_ref_single(pred_edges[i].reshape(-1, 1, h, w),
                                        gt_edges[i].reshape(-1, 1, h, w))
                + 5.0 * _edge_loss_ref_single(combined.reshape(-1, 1, h, w),
                                              gt_edges[i].reshape(-1, 1, h, w)))
    return loss


if __name__ == "__main__":
    # EdgeLoss has no learnable parameters; only inputs are constructed.
    key = jax.random.PRNGKey(0)
    B, T, H, W = 2, 5, 16, 16
    k = jax.random.split(key, 5)
    pred_edges = [
        jax.random.normal(k[0], (B, T - 1, 1, H, W), jnp.float32),
        jax.random.normal(k[1], (B, T - 1, 1, H, W), jnp.float32),
    ]
    gt_edges = [
        (jax.random.uniform(k[2], (B, T - 1, 1, H, W)) > 0.7).astype(jnp.float32),
        (jax.random.uniform(k[3], (B, T - 1, 1, H, W)) > 0.7).astype(jnp.float32),
    ]
    masks = (jax.random.uniform(k[4], (B, T, 1, H, W)) > 0.5).astype(jnp.float32)

    ref = jax.block_until_ready(edge_loss_forward_ref(pred_edges, gt_edges, masks))

    # General path (no binary assumption).
    loss = jax.block_until_ready(
        edge_loss_forward(pred_edges, gt_edges, masks, assume_binary=False))
    assert jnp.allclose(loss, ref, rtol=1e-4, atol=1e-5), (loss, ref)

    # Fast path (gt / masks here are strictly binary, so it must be exact).
    loss_bin = jax.block_until_ready(
        edge_loss_forward(pred_edges, gt_edges, masks, assume_binary=True))
    assert jnp.allclose(loss_bin, ref, rtol=1e-4, atol=1e-5), (loss_bin, ref)

    print("KERNEL_OK")
</pallas_src>

<mosaic_0001>
module attributes {stable_mosaic.version = 11 : i64} {
  func.func @kernel(%arg0: i32, %arg1: i32, %arg2: memref<8x256xf32, #tpu.memory_space<vmem>>, %arg3: memref<8x256xf32, #tpu.memory_space<vmem>>, %arg4: memref<8x256xf32, #tpu.memory_space<vmem>>, %arg5: memref<1x8x128xf32, #tpu.memory_space<vmem>>, %arg6: memref<1x8x128xf32, #tpu.memory_space<vmem>>, %arg7: memref<8x1xf32, #tpu.memory_space<vmem>>, %arg8: memref<8x1xf32, #tpu.memory_space<vmem>>, %arg9: memref<8x1xf32, #tpu.memory_space<vmem>>, %arg10: memref<8x1xf32, #tpu.memory_space<vmem>>, %arg11: memref<8x1xf32, #tpu.memory_space<vmem>>) attributes {dimension_semantics = [#tpu.dimension_semantics<parallel>, #tpu.dimension_semantics<arbitrary>], iteration_bounds = array<i64: 1, 1>, scalar_prefetch = 0 : i64, scratch_operands = 5 : i64, tpu.core_type = #tpu.core_type<tc>, window_params = [{transform_indices = @transform_0, window_bounds = array<i64: 8, 256>}, {transform_indices = @transform_1, window_bounds = array<i64: 8, 256>}, {transform_indices = @transform_2, window_bounds = array<i64: 8, 256>}, {transform_indices = @transform_3, window_bounds = array<i64: 1, 8, 128>}, {transform_indices = @transform_4, window_bounds = array<i64: 1, 8, 128>}]} {
    %c0_i32 = arith.constant 0 : i32
    %0 = arith.cmpi eq, %arg1, %c0_i32 : i32
    %1 = arith.extui %0 : i1 to i32
    %c0_i32_0 = arith.constant 0 : i32
    %2 = arith.cmpi ne, %1, %c0_i32_0 : i32
    scf.if %2 {
      %cst_37 = arith.constant 0.000000e+00 : f32
      %63 = vector.broadcast %cst_37 : f32 to vector<8x1xf32>
      %c0_38 = arith.constant 0 : index
      %c0_39 = arith.constant 0 : index
      %64 = vector.load %arg7[%c0_38, %c0_39] : memref<8x1xf32, #tpu.memory_space<vmem>>, vector<8x1xf32>
      tpu.vector_store %arg7[%c0_38, %c0_39], %63 {strides = array<i32>} : memref<8x1xf32, #tpu.memory_space<vmem>>, vector<8x1xf32>,
      %cst_40 = arith.constant 0.000000e+00 : f32
      %65 = vector.broadcast %cst_40 : f32 to vector<8x1xf32>
      %c0_41 = arith.constant 0 : index
      %c0_42 = arith.constant 0 : index
      %66 = vector.load %arg8[%c0_41, %c0_42] : memref<8x1xf32, #tpu.memory_space<vmem>>, vector<8x1xf32>
      tpu.vector_store %arg8[%c0_41, %c0_42], %65 {strides = array<i32>} : memref<8x1xf32, #tpu.memory_space<vmem>>, vector<8x1xf32>,
      %cst_43 = arith.constant 0.000000e+00 : f32
      %67 = vector.broadcast %cst_43 : f32 to vector<8x1xf32>
      %c0_44 = arith.constant 0 : index
      %c0_45 = arith.constant 0 : index
      %68 = vector.load %arg9[%c0_44, %c0_45] : memref<8x1xf32, #tpu.memory_space<vmem>>, vector<8x1xf32>
      tpu.vector_store %arg9[%c0_44, %c0_45], %67 {strides = array<i32>} : memref<8x1xf32, #tpu.memory_space<vmem>>, vector<8x1xf32>,
      %cst_46 = arith.constant 0.000000e+00 : f32
      %69 = vector.broadcast %cst_46 : f32 to vector<8x1xf32>
      %c0_47 = arith.constant 0 : index
      %c0_48 = arith.constant 0 : index
      %70 = vector.load %arg10[%c0_47, %c0_48] : memref<8x1xf32, #tpu.memory_space<vmem>>, vector<8x1xf32>
      tpu.vector_store %arg10[%c0_47, %c0_48], %69 {strides = array<i32>} : memref<8x1xf32, #tpu.memory_space<vmem>>, vector<8x1xf32>,
      %cst_49 = arith.constant 0.000000e+00 : f32
      %71 = vector.broadcast %cst_49 : f32 to vector<8x1xf32>
      %c0_50 = arith.constant 0 : index
      %c0_51 = arith.constant 0 : index
      %72 = vector.load %arg11[%c0_50, %c0_51] : memref<8x1xf32, #tpu.memory_space<vmem>>, vector<8x1xf32>
      tpu.vector_store %arg11[%c0_50, %c0_51], %71 {strides = array<i32>} : memref<8x1xf32, #tpu.memory_space<vmem>>, vector<8x1xf32>,
    } else {
    }
    %c0 = arith.constant 0 : index
    %c0_1 = arith.constant 0 : index
    %3 = vector.load %arg2[%c0, %c0_1] : memref<8x256xf32, #tpu.memory_space<vmem>>, vector<8x256xf32>
    %c0_2 = arith.constant 0 : index
    %c0_3 = arith.constant 0 : index
    %4 = vector.load %arg3[%c0_2, %c0_3] : memref<8x256xf32, #tpu.memory_space<vmem>>, vector<8x256xf32>
    %c0_4 = arith.constant 0 : index
    %c0_5 = arith.constant 0 : index
    %5 = vector.load %arg4[%c0_4, %c0_5] : memref<8x256xf32, #tpu.memory_space<vmem>>, vector<8x256xf32>
    %cst = arith.constant 5.000000e-01 : f32
    %6 = vector.broadcast %cst : f32 to vector<8x256xf32>
    %7 = arith.cmpf ogt, %4, %6 : vector<8x256xf32>
    %8 = arith.extui %7 : vector<8x256xi1> to vector<8x256xi32>
    %9 = arith.sitofp %8 : vector<8x256xi32> to vector<8x256xf32>
    %cst_6 = arith.constant 0.000000e+00 : f32
    %10 = vector.broadcast %cst_6 : f32 to vector<8x256xf32>
    %11 = arith.maximumf %3, %10 : vector<8x256xf32>
    %12 = arith.mulf %3, %4 : vector<8x256xf32>
    %13 = arith.subf %11, %12 : vector<8x256xf32>
    %14 = math.absf %3 : vector<8x256xf32>
    %cst_7 = arith.constant 0.000000e+00 : f32
    %15 = vector.broadcast %cst_7 : f32 to vector<8x256xf32>
    %16 = arith.subf %15, %14 : vector<8x256xf32>
    %17 = math.exp %16 : vector<8x256xf32>
    %18 = math.log1p %17 : vector<8x256xf32>
    %19 = arith.addf %13, %18 : vector<8x256xf32>
    %20 = arith.subf %3, %4 : vector<8x256xf32>
    %21 = arith.mulf %5, %20 : vector<8x256xf32>
    %22 = arith.addf %4, %21 : vector<8x256xf32>
    %cst_8 = arith.constant 0.000000e+00 : f32
    %23 = vector.broadcast %cst_8 : f32 to vector<8x256xf32>
    %24 = arith.maximumf %22, %23 : vector<8x256xf32>
    %25 = arith.mulf %22, %4 : vector<8x256xf32>
    %26 = arith.subf %24, %25 : vector<8x256xf32>
    %27 = math.absf %22 : vector<8x256xf32>
    %cst_9 = arith.constant 0.000000e+00 : f32
    %28 = vector.broadcast %cst_9 : f32 to vector<8x256xf32>
    %29 = arith.subf %28, %27 : vector<8x256xf32>
    %30 = math.exp %29 : vector<8x256xf32>
    %31 = math.log1p %30 : vector<8x256xf32>
    %32 = arith.addf %26, %31 : vector<8x256xf32>
    %c0_10 = arith.constant 0 : index
    %c0_11 = arith.constant 0 : index
    %33 = vector.load %arg7[%c0_10, %c0_11] : memref<8x1xf32, #tpu.memory_space<vmem>>, vector<8x1xf32>
    %cst_12 = arith.constant dense<0.000000e+00> : vector<8xf32>
    %34 = vector.multi_reduction <add>, %9, %cst_12 [1] : vector<8x256xf32> to vector<8xf32>
    %35 = vector.shape_cast %34 : vector<8xf32> to vector<8x1xf32>
    %36 = arith.addf %33, %35 : vector<8x1xf32>
    %c0_13 = arith.constant 0 : index
    %c0_14 = arith.constant 0 : index
    %37 = vector.load %arg7[%c0_13, %c0_14] : memref<8x1xf32, #tpu.memory_space<vmem>>, vector<8x1xf32>
    tpu.vector_store %arg7[%c0_13, %c0_14], %36 {strides = array<i32>} : memref<8x1xf32, #tpu.memory_space<vmem>>, vector<8x1xf32>,
    %c0_15 = arith.constant 0 : index
    %c0_16 = arith.constant 0 : index
    %38 = vector.load %arg8[%c0_15, %c0_16] : memref<8x1xf32, #tpu.memory_space<vmem>>, vector<8x1xf32>
    %cst_17 = arith.constant dense<0.000000e+00> : vector<8xf32>
    %39 = vector.multi_reduction <add>, %19, %cst_17 [1] : vector<8x256xf32> to vector<8xf32>
    %40 = vector.shape_cast %39 : vector<8xf32> to vector<8x1xf32>
    %41 = arith.addf %38, %40 : vector<8x1xf32>
    %c0_18 = arith.constant 0 : index
    %c0_19 = arith.constant 0 : index
    %42 = vector.load %arg8[%c0_18, %c0_19] : memref<8x1xf32, #tpu.memory_space<vmem>>, vector<8x1xf32>
    tpu.vector_store %arg8[%c0_18, %c0_19], %41 {strides = array<i32>} : memref<8x1xf32, #tpu.memory_space<vmem>>, vector<8x1xf32>,
    %c0_20 = arith.constant 0 : index
    %c0_21 = arith.constant 0 : index
    %43 = vector.load %arg9[%c0_20, %c0_21] : memref<8x1xf32, #tpu.memory_space<vmem>>, vector<8x1xf32>
    %44 = arith.mulf %9, %19 : vector<8x256xf32>
    %cst_22 = arith.constant dense<0.000000e+00> : vector<8xf32>
    %45 = vector.multi_reduction <add>, %44, %cst_22 [1] : vector<8x256xf32> to vector<8xf32>
    %46 = vector.shape_cast %45 : vector<8xf32> to vector<8x1xf32>
    %47 = arith.addf %43, %46 : vector<8x1xf32>
    %c0_23 = arith.constant 0 : index
    %c0_24 = arith.constant 0 : index
    %48 = vector.load %arg9[%c0_23, %c0_24] : memref<8x1xf32, #tpu.memory_space<vmem>>, vector<8x1xf32>
    tpu.vector_store %arg9[%c0_23, %c0_24], %47 {strides = array<i32>} : memref<8x1xf32, #tpu.memory_space<vmem>>, vector<8x1xf32>,
    %c0_25 = arith.constant 0 : index
    %c0_26 = arith.constant 0 : index
    %49 = vector.load %arg10[%c0_25, %c0_26] : memref<8x1xf32, #tpu.memory_space<vmem>>, vector<8x1xf32>
    %cst_27 = arith.constant dense<0.000000e+00> : vector<8xf32>
    %50 = vector.multi_reduction <add>, %32, %cst_27 [1] : vector<8x256xf32> to vector<8xf32>
    %51 = vector.shape_cast %50 : vector<8xf32> to vector<8x1xf32>
    %52 = arith.addf %49, %51 : vector<8x1xf32>
    %c0_28 = arith.constant 0 : index
    %c0_29 = arith.constant 0 : index
    %53 = vector.load %arg10[%c0_28, %c0_29] : memref<8x1xf32, #tpu.memory_space<vmem>>, vector<8x1xf32>
    tpu.vector_store %arg10[%c0_28, %c0_29], %52 {strides = array<i32>} : memref<8x1xf32, #tpu.memory_space<vmem>>, vector<8x1xf32>,
    %c0_30 = arith.constant 0 : index
    %c0_31 = arith.constant 0 : index
    %54 = vector.load %arg11[%c0_30, %c0_31] : memref<8x1xf32, #tpu.memory_space<vmem>>, vector<8x1xf32>
    %55 = arith.mulf %9, %32 : vector<8x256xf32>
    %cst_32 = arith.constant dense<0.000000e+00> : vector<8xf32>
    %56 = vector.multi_reduction <add>, %55, %cst_32 [1] : vector<8x256xf32> to vector<8xf32>
    %57 = vector.shape_cast %56 : vector<8xf32> to vector<8x1xf32>
    %58 = arith.addf %54, %57 : vector<8x1xf32>
    %c0_33 = arith.constant 0 : index
    %c0_34 = arith.constant 0 : index
    %59 = vector.load %arg11[%c0_33, %c0_34] : memref<8x1xf32, #tpu.memory_space<vmem>>, vector<8x1xf32>
    tpu.vector_store %arg11[%c0_33, %c0_34], %58 {strides = array<i32>} : memref<8x1xf32, #tpu.memory_space<vmem>>, vector<8x1xf32>,
    %c0_i32_35 = arith.constant 0 : i32
    %60 = arith.cmpi eq, %arg1, %c0_i32_35 : i32
    %61 = arith.extui %60 : i1 to i32
    %c0_i32_36 = arith.constant 0 : i32
    %62 = arith.cmpi ne, %61, %c0_i32_36 : i32
    scf.if %62 {
      %c0_37 = arith.constant 0 : index
      %c0_38 = arith.constant 0 : index
      %63 = vector.load %arg7[%c0_37, %c0_38] : memref<8x1xf32, #tpu.memory_space<vmem>>, vector<8x1xf32>
      %cst_39 = arith.constant 2.560000e+02 : f32
      %64 = vector.broadcast %cst_39 : f32 to vector<8x1xf32>
      %65 = arith.divf %63, %64 : vector<8x1xf32>
      %cst_40 = arith.constant 2.560000e+02 : f32
      %66 = vector.broadcast %cst_40 : f32 to vector<8x1xf32>
      %67 = arith.subf %66, %63 : vector<8x1xf32>
      %cst_41 = arith.constant 2.560000e+02 : f32
      %68 = vector.broadcast %cst_41 : f32 to vector<8x1xf32>
      %69 = arith.divf %67, %68 : vector<8x1xf32>
      %c0_42 = arith.constant 0 : index
      %c0_43 = arith.constant 0 : index
      %70 = vector.load %arg9[%c0_42, %c0_43] : memref<8x1xf32, #tpu.memory_space<vmem>>, vector<8x1xf32>
      %71 = arith.mulf %69, %70 : vector<8x1xf32>
      %c0_44 = arith.constant 0 : index
      %c0_45 = arith.constant 0 : index
      %72 = vector.load %arg8[%c0_44, %c0_45] : memref<8x1xf32, #tpu.memory_space<vmem>>, vector<8x1xf32>
      %c0_46 = arith.constant 0 : index
      %c0_47 = arith.constant 0 : index
      %73 = vector.load %arg9[%c0_46, %c0_47] : memref<8x1xf32, #tpu.memory_space<vmem>>, vector<8x1xf32>
      %74 = arith.subf %72, %73 : vector<8x1xf32>
      %75 = arith.mulf %65, %74 : vector<8x1xf32>
      %76 = arith.addf %71, %75 : vector<8x1xf32>
      %c0_48 = arith.constant 0 : index
      %c0_49 = arith.constant 0 : index
      %77 = vector.load %arg11[%c0_48, %c0_49] : memref<8x1xf32, #tpu.memory_space<vmem>>, vector<8x1xf32>
      %78 = arith.mulf %69, %77 : vector<8x1xf32>
      %c0_50 = arith.constant 0 : index
      %c0_51 = arith.constant 0 : index
      %79 = vector.load %arg10[%c0_50, %c0_51] : memref<8x1xf32, #tpu.memory_space<vmem>>, vector<8x1xf32>
      %c0_52 = arith.constant 0 : index
      %c0_53 = arith.constant 0 : index
      %80 = vector.load %arg11[%c0_52, %c0_53] : memref<8x1xf32, #tpu.memory_space<vmem>>, vector<8x1xf32>
      %81 = arith.subf %79, %80 : vector<8x1xf32>
      %82 = arith.mulf %65, %81 : vector<8x1xf32>
      %83 = arith.addf %78, %82 : vector<8x1xf32>
      %84 = vector.shape_cast %76 : vector<8x1xf32> to vector<1x8x1xf32>
      %cst_54 = arith.constant dense<0.000000e+00> : vector<1xf32>
      %85 = vector.multi_reduction <add>, %84, %cst_54 [1, 2] : vector<1x8x1xf32> to vector<1xf32>
      %86 = vector.shape_cast %85 : vector<1xf32> to vector<1x1x1xf32>
      %87 = vector.extract %86[0, 0, 0] : f32 from vector<1x1x1xf32>
      %88 = vector.broadcast %87 : f32 to vector<1x8x128xf32>
      %c0_55 = arith.constant 0 : index
      %c0_56 = arith.constant 0 : index
      %c0_57 = arith.constant 0 : index
      %89 = vector.load %arg5[%c0_55, %c0_56, %c0_57] : memref<1x8x128xf32, #tpu.memory_space<vmem>>, vector<1x8x128xf32>
      tpu.vector_store %arg5[%c0_55, %c0_56, %c0_57], %88 {strides = array<i32>} : memref<1x8x128xf32, #tpu.memory_space<vmem>>, vector<1x8x128xf32>,
      %90 = vector.shape_cast %83 : vector<8x1xf32> to vector<1x8x1xf32>
      %cst_58 = arith.constant dense<0.000000e+00> : vector<1xf32>
      %91 = vector.multi_reduction <add>, %90, %cst_58 [1, 2] : vector<1x8x1xf32> to vector<1xf32>
      %92 = vector.shape_cast %91 : vector<1xf32> to vector<1x1x1xf32>
      %93 = vector.extract %92[0, 0, 0] : f32 from vector<1x1x1xf32>
      %94 = vector.broadcast %93 : f32 to vector<1x8x128xf32>
      %c0_59 = arith.constant 0 : index
      %c0_60 = arith.constant 0 : index
      %c0_61 = arith.constant 0 : index
      %95 = vector.load %arg6[%c0_59, %c0_60, %c0_61] : memref<1x8x128xf32, #tpu.memory_space<vmem>>, vector<1x8x128xf32>
      tpu.vector_store %arg6[%c0_59, %c0_60, %c0_61], %94 {strides = array<i32>} : memref<1x8x128xf32, #tpu.memory_space<vmem>>, vector<1x8x128xf32>,
    } else {
    }
    return
  }
  func.func @transform_0(%arg0: i32, %arg1: i32) -> (i32, i32) {
    %c0_i32 = arith.constant 0 : i32
    return %arg0, %arg1 : i32, i32
  }
  func.func @transform_1(%arg0: i32, %arg1: i32) -> (i32, i32) {
    %c0_i32 = arith.constant 0 : i32
    return %arg0, %arg1 : i32, i32
  }
  func.func @transform_2(%arg0: i32, %arg1: i32) -> (i32, i32) {
    %c0_i32 = arith.constant 0 : i32
    return %arg0, %arg1 : i32, i32
  }
  func.func @transform_3(%arg0: i32, %arg1: i32) -> (i32, i32, i32) {
    %c0_i32 = arith.constant 0 : i32
    %c0_i32_0 = arith.constant 0 : i32
    %c0_i32_1 = arith.constant 0 : i32
    return %arg0, %c0_i32, %c0_i32_0 : i32, i32, i32
  }
  func.func @transform_4(%arg0: i32, %arg1: i32) -> (i32, i32, i32) {
    %c0_i32 = arith.constant 0 : i32
    %c0_i32_0 = arith.constant 0 : i32
    %c0_i32_1 = arith.constant 0 : i32
    return %arg0, %c0_i32, %c0_i32_0 : i32, i32, i32
  }
}

</mosaic_0001>

<llo_original>
// kernel: tpu_custom_call.1
$region0: #{tpu_custom_call.1}
  #allocation0 [shape = 'u32[]', space=smem, size = 0x4, offset = 0x4, fixed_abs, tag = 'smem constant byte address 0x4 - core index']
  #allocation1 [shape = 'u32[72,128]{1,0:T(1,128)}', space=vmem, size = 0x9000, scoped, tag = 'internal scratch']
  #allocation2 [shape = 'f32[8,1]{1,0:T(8,128)}', space=vmem, size = 0x1000, scoped, tag = 'scratch operand']
  #allocation3 [shape = 'f32[8,1]{1,0:T(8,128)}', space=vmem, size = 0x1000, scoped, tag = 'scratch operand']
  #allocation4 [shape = 'f32[8,1]{1,0:T(8,128)}', space=vmem, size = 0x1000, scoped, tag = 'scratch operand']
  #allocation5 [shape = 'f32[8,1]{1,0:T(8,128)}', space=vmem, size = 0x1000, scoped, tag = 'scratch operand']
  #allocation6 [shape = 'f32[8,1]{1,0:T(8,128)}', space=vmem, size = 0x1000, scoped, tag = 'scratch operand']
  %s0 = inlined_call_operand.hbm [shape: f32[8,256], index: 0, kind: input, shape index: {}]
  %s1 = inlined_call_operand.hbm [shape: f32[8,256], index: 1, kind: input, shape index: {}]
  %s2 = inlined_call_operand.hbm [shape: f32[8,256], index: 2, kind: input, shape index: {}]
  %s3 = inlined_call_operand.hbm [shape: f32[1,8,128], index: 3, kind: output, shape index: {0}]
  %s4 = inlined_call_operand.hbm [shape: f32[1,8,128], index: 4, kind: output, shape index: {1}]
  %5 = xla_tuple %s3, %s4
  %s6 = sld [smem:[#allocation0]]
  $region50: #{tpu_custom_call.1} parent=0
    _
  %s8 = ssub.s32 1, %s6
  %s9 = scalar_select 0, %s8, %s6
  $region1: #{tpu_custom_call.1} parent=0
    #allocation7 [shape = 'u8[8192]{0}', space=vmem, size = 0x2000, scoped, tag = 'input window, operand 0, single buffered']
    #allocation8 [shape = 's32[1]{0}', space=sflag, size = 0x4, scoped, tag = 'scoped memory for tpu_custom_call.1']
    #allocation9 [shape = 's32[1]{0}', space=sflag, size = 0x4, scoped, tag = 'scoped memory for tpu_custom_call.1']
    #allocation10 [shape = 'u8[8192]{0}', space=vmem, size = 0x2000, scoped, tag = 'input window, operand 1, single buffered']
    #allocation11 [shape = 's32[1]{0}', space=sflag, size = 0x4, scoped, tag = 'scoped memory for tpu_custom_call.1']
    #allocation12 [shape = 'u8[8192]{0}', space=vmem, size = 0x2000, scoped, tag = 'input window, operand 2, single buffered']
    #allocation13 [shape = 'u8[4096]{0}', space=vmem, size = 0x1000, scoped, tag = 'output window, operand 0, single buffered']
    #allocation14 [shape = 'u8[4096]{0}', space=vmem, size = 0x1000, scoped, tag = 'output window, operand 1, single buffered']
    #allocation15 [shape = 's32[1]{0}', space=sflag, size = 0x4, scoped, tag = 'scoped memory for tpu_custom_call.1']
    %10 = vsyncpa [#allocation8], 0
    %11 = vsyncpa [#allocation11], 0
    %12 = vsyncpa [#allocation9], 0
    %13 = vsyncpa [#allocation15], 0
    // Predicated region
    $region2: #{tpu_custom_call.1} parent=1 // pred_check
      _
    $region3: #{tpu_custom_call.1} parent=1 // pred_check_branch
      %15 = sbr.rel (0) target = $region5
    $region4: #{tpu_custom_call.1} parent=1 // pred_region
      %17 = vsyncadd [#allocation8], 0
      %s19 = sshll.u32 %s0, 4
      %s20 = int_to_ptr.hbm [resolvable:$true] %s19
      %s21 = sshll.u32 [#allocation7], 4
      %s22 = int_to_ptr.vmem [resolvable:$true] %s21
      %24 = dma.hbm_to_vmem [thread:$0]  %s20, 256, %s22, [#allocation8]
    $region5: #{tpu_custom_call.1} parent=1 // pred_fallthru
      _
    // Predicated region
    $region6: #{tpu_custom_call.1} parent=1 // pred_check
      _
    $region7: #{tpu_custom_call.1} parent=1 // pred_check_branch
      %26 = sbr.rel (0) target = $region9
    $region8: #{tpu_custom_call.1} parent=1 // pred_region
      %28 = vsyncadd [#allocation11], 0
      %s30 = sshll.u32 %s1, 4
      %s31 = int_to_ptr.hbm [resolvable:$true] %s30
      %s32 = sshll.u32 [#allocation10], 4
      %s33 = int_to_ptr.vmem [resolvable:$true] %s32
      %35 = dma.hbm_to_vmem [thread:$0]  %s31, 256, %s33, [#allocation11]
    $region9: #{tpu_custom_call.1} parent=1 // pred_fallthru
      _
    // Predicated region
    $region10: #{tpu_custom_call.1} parent=1 // pred_check
      _
    $region11: #{tpu_custom_call.1} parent=1 // pred_check_branch
      %37 = sbr.rel (0) target = $region13
    $region12: #{tpu_custom_call.1} parent=1 // pred_region
      %39 = vsyncadd [#allocation11], 0
      %s41 = sshll.u32 %s2, 4
      %s42 = int_to_ptr.hbm [resolvable:$true] %s41
      %s43 = sshll.u32 [#allocation12], 4
      %s44 = int_to_ptr.vmem [resolvable:$true] %s43
      %46 = dma.hbm_to_vmem [thread:$0]  %s42, 256, %s44, [#allocation11]
    $region13: #{tpu_custom_call.1} parent=1 // pred_fallthru
      _
    // Predicated region
    $region14: #{tpu_custom_call.1} parent=1 // pred_check
      _
    $region15: #{tpu_custom_call.1} parent=1 // pred_check_branch
      %48 = sbr.rel (0) target = $region17
    $region16: #{tpu_custom_call.1} parent=1 // pred_region
      %50 = dma.done [#allocation8], 256
    $region17: #{tpu_custom_call.1} parent=1 // pred_fallthru
      _
    // Predicated region
    $region18: #{tpu_custom_call.1} parent=1 // pred_check
      _
    $region19: #{tpu_custom_call.1} parent=1 // pred_check_branch
      %52 = sbr.rel (0) target = $region21
    $region20: #{tpu_custom_call.1} parent=1 // pred_region
      %54 = dma.done [#allocation11], 256
    $region21: #{tpu_custom_call.1} parent=1 // pred_fallthru
      _
    // Predicated region
    $region22: #{tpu_custom_call.1} parent=1 // pred_check
      _
    $region23: #{tpu_custom_call.1} parent=1 // pred_check_branch
      %56 = sbr.rel (0) target = $region25
    $region24: #{tpu_custom_call.1} parent=1 // pred_region
      %58 = dma.done [#allocation11], 256
    $region25: #{tpu_custom_call.1} parent=1 // pred_fallthru
      _
    %p59 = scmp.eq.s32.totalorder 0, 0
    // Predicated region
    $region26: #{tpu_custom_call.1} parent=1 // pred_check
      %p60 = pneg %p59
    $region27: #{tpu_custom_call.1} parent=1 // pred_check_branch
      %62 = sbr.rel (%p60) target = $region29
    $region28: #{tpu_custom_call.1} parent=1 // pred_region
      %vm63 = vcmask 7168
      %64 = vst.msk [vmem:[#allocation2] sm:$0xff] %vm63, 0.0
      %65 = vst.msk [vmem:[#allocation3] sm:$0xff] %vm63, 0.0
      %66 = vst.msk [vmem:[#allocation4] sm:$0xff] %vm63, 0.0
      %67 = vst.msk [vmem:[#allocation5] sm:$0xff] %vm63, 0.0
      %68 = vst.msk [vmem:[#allocation6] sm:$0xff] %vm63, 0.0
    $region29: #{tpu_custom_call.1} parent=1 // pred_fallthru
      _
    %v69 = vld [vmem:[#allocation7] sm:$0xff]
    %v70 = vld [vmem:[#allocation7 + $0x8] sm:$0xff]
    %v71 = vld [vmem:[#allocation10] sm:$0xff]
    %v72 = vld [vmem:[#allocation10 + $0x8] sm:$0xff]
    %v73 = vld [vmem:[#allocation12] sm:$0xff]
    %v74 = vld [vmem:[#allocation12 + $0x8] sm:$0xff]
    %vm75 = vcmp.gt.f32.partialorder %v71, 0.5
    %vm76 = vcmp.gt.f32.partialorder %v72, 0.5
    %v77 = vsel %vm75, 1, 0
    %v78 = vsel %vm76, 1, 0
    %v79 = vcvt.s32.f32 %v77
    %v80 = vcvt.s32.f32 %v78
    %v81 = vmax.f32 %v69, 0.0
    %v82 = vmax.f32 %v70, 0.0
    %v83 = vmul.f32 %v69, %v71
    %v84 = vmul.f32 %v70, %v72
    %v85 = vsub.f32 %v81, %v83
    %v86 = vsub.f32 %v82, %v84
    %v87 = vand.u32 2147483647, %v69
    %v88 = vand.u32 2147483647, %v70
    %v89 = vsub.f32 0.0, %v87
    %v90 = vsub.f32 0.0, %v88
    %v91 = vmul.f32 %v89, 1.442695
    %v92 = vpow.pop %v91
    %v93 = vmul.f32 %v90, 1.442695
    %v94 = vpow.pop %v93
    %v95 = vadd.f32 %v92, 1.0
    %v96 = vlog2.pop %v95
    %v97 = vmul.f32 %v96, 0.6931472
    %v98 = vmul.f32 -0.5, %v92
    %v99 = vadd.f32 %v98, 1.0
    %v100 = vmul.f32 %v99, %v92
    %v101 = vand.u32 2147483647, %v92
    %vm102 = vcmp.lt.f32.partialorder %v101, 0.0004427343
    %v103 = vsel %vm102, %v100, %v97
    %v104 = vadd.f32 %v94, 1.0
    %v105 = vlog2.pop %v104
    %v106 = vmul.f32 %v105, 0.6931472
    %v107 = vmul.f32 -0.5, %v94
    %v108 = vadd.f32 %v107, 1.0
    %v109 = vmul.f32 %v108, %v94
    %v110 = vand.u32 2147483647, %v94
    %vm111 = vcmp.lt.f32.partialorder %v110, 0.0004427343
    %v112 = vsel %vm111, %v109, %v106
    %v113 = vadd.f32 %v85, %v103
    %v114 = vadd.f32 %v86, %v112
    %v115 = vsub.f32 %v69, %v71
    %v116 = vsub.f32 %v70, %v72
    %v117 = vmul.f32 %v73, %v115
    %v118 = vmul.f32 %v74, %v116
    %v119 = vadd.f32 %v71, %v117
    %v120 = vadd.f32 %v72, %v118
    %v121 = vmax.f32 %v119, 0.0
    %v122 = vmax.f32 %v120, 0.0
    %v123 = vmul.f32 %v119, %v71
    %v124 = vmul.f32 %v120, %v72
    %v125 = vsub.f32 %v121, %v123
    %v126 = vsub.f32 %v122, %v124
    %v127 = vand.u32 2147483647, %v119
    %v128 = vand.u32 2147483647, %v120
    %v129 = vsub.f32 0.0, %v127
    %v130 = vsub.f32 0.0, %v128
    %v131 = vmul.f32 %v129, 1.442695
    %v132 = vpow.pop %v131
    %v133 = vmul.f32 %v130, 1.442695
    %v134 = vpow.pop %v133
    %v135 = vadd.f32 %v132, 1.0
    %v136 = vlog2.pop %v135
    %v137 = vmul.f32 %v136, 0.6931472
    %v138 = vmul.f32 -0.5, %v132
    %v139 = vadd.f32 %v138, 1.0
    %v140 = vmul.f32 %v139, %v132
    %v141 = vand.u32 2147483647, %v132
    %vm142 = vcmp.lt.f32.partialorder %v141, 0.0004427343
    %v143 = vsel %vm142, %v140, %v137
    %v144 = vadd.f32 %v134, 1.0
    %v145 = vlog2.pop %v144
    %v146 = vmul.f32 %v145, 0.6931472
    %v147 = vmul.f32 -0.5, %v134
    %v148 = vadd.f32 %v147, 1.0
    %v149 = vmul.f32 %v148, %v134
    %v150 = vand.u32 2147483647, %v134
    %vm151 = vcmp.lt.f32.partialorder %v150, 0.0004427343
    %v152 = vsel %vm151, %v149, %v146
    %v153 = vadd.f32 %v125, %v143
    %v154 = vadd.f32 %v126, %v152
    %v155 = vld [vmem:[#allocation2] sm:$0xff]
    %v156 = vadd.f32 %v79, %v80
    %157 = vadd.xlane.f32.xlu0 %v156
    %v158 = vpop.xlane.xlu0 %157
    %v159 = vadd.f32 %v155, %v158
    %vm160 = vcmask 7168
    %161 = vst.msk [vmem:[#allocation2] sm:$0xff] %vm160, %v159
    %v162 = vld [vmem:[#allocation3] sm:$0xff]
    %v163 = vadd.f32 %v113, %v114
    %164 = vadd.xlane.f32.xlu0 %v163
    %v165 = vpop.xlane.xlu0 %164
    %v166 = vadd.f32 %v162, %v165
    %167 = vst.msk [vmem:[#allocation3] sm:$0xff] %vm160, %v166
    %v168 = vld [vmem:[#allocation4] sm:$0xff]
    %v169 = vmul.f32 %v79, %v113
    %v170 = vmul.f32 %v80, %v114
    %v171 = vadd.f32 %v169, %v170
    %172 = vadd.xlane.f32.xlu0 %v171
    %v173 = vpop.xlane.xlu0 %172
    %v174 = vadd.f32 %v168, %v173
    %175 = vst.msk [vmem:[#allocation4] sm:$0xff] %vm160, %v174
    %v176 = vld [vmem:[#allocation5] sm:$0xff]
    %v177 = vadd.f32 %v153, %v154
    %178 = vadd.xlane.f32.xlu0 %v177
    %v179 = vpop.xlane.xlu0 %178
    %v180 = vadd.f32 %v176, %v179
    %181 = vst.msk [vmem:[#allocation5] sm:$0xff] %vm160, %v180
    %v182 = vld [vmem:[#allocation6] sm:$0xff]
    %v183 = vmul.f32 %v79, %v153
    %v184 = vmul.f32 %v80, %v154
    %v185 = vadd.f32 %v183, %v184
    %186 = vadd.xlane.f32.xlu0 %v185
    %v187 = vpop.xlane.xlu0 %186
    %v188 = vadd.f32 %v182, %v187
    %189 = vst.msk [vmem:[#allocation6] sm:$0xff] %vm160, %v188
    // Predicated region
    $region30: #{tpu_custom_call.1} parent=1 // pred_check
      %p190 = pneg %p59
    $region31: #{tpu_custom_call.1} parent=1 // pred_check_branch
      %192 = sbr.rel (%p190) target = $region33
    $region32: #{tpu_custom_call.1} parent=1 // pred_region
      %v193 = vld [vmem:[#allocation2] sm:$0xff]
      %v194 = vrcp.pop 256.0
      %v195 = vmul.f32 256.0, %v194
      %v196 = vsub.f32 1.0, %v195
      %v197 = vmul.f32 %v194, %v196
      %v198 = vadd.f32 %v194, %v197
      %vm199 = vweird.f32 %v194
      %v200 = vsel %vm199, %v194, %v198
      %v201 = vmul.f32 %v193, %v200
      %v202 = vsub.f32 256.0, %v193
      %v203 = vmul.f32 %v202, %v200
      %v204 = vld [vmem:[#allocation4] sm:$0xff]
      %v205 = vmul.f32 %v203, %v204
      %v206 = vld [vmem:[#allocation3] sm:$0xff]
      %v207 = vsub.f32 %v206, %v204
      %v208 = vmul.f32 %v201, %v207
      %v209 = vadd.f32 %v205, %v208
      %v210 = vld [vmem:[#allocation6] sm:$0xff]
      %v211 = vmul.f32 %v203, %v210
      %v212 = vld [vmem:[#allocation5] sm:$0xff]
      %v213 = vsub.f32 %v212, %v210
      %v214 = vmul.f32 %v201, %v213
      %v215 = vadd.f32 %v211, %v214
      %v216 = vsel %vm160, %v209, 0.0
      %217 = vadd.xlane.f32.xlu0 %v216
      %v218 = vpop.xlane.xlu0 %217
      %v219 = vrot.slane %v218, 4
      %v220 = vadd.f32 %v218, %v219
      %v221 = vrot.slane %v220, 2
      %v222 = vadd.f32 %v220, %v221
      %v223 = vrot.slane %v222, 1
      %v224 = vadd.f32 %v222, %v223
      %s225 = vtos %v224
      %v226 = vstv %s225
      %227 = vst [vmem:[#allocation13] sm:$0xff] %v226
      %v228 = vsel %vm160, %v215, 0.0
      %229 = vadd.xlane.f32.xlu0 %v228
      %v230 = vpop.xlane.xlu0 %229
      %v231 = vrot.slane %v230, 4
      %v232 = vadd.f32 %v230, %v231
      %v233 = vrot.slane %v232, 2
      %v234 = vadd.f32 %v232, %v233
      %v235 = vrot.slane %v234, 1
      %v236 = vadd.f32 %v234, %v235
      %s237 = vtos %v236
      %v238 = vstv %s237
      %239 = vst [vmem:[#allocation14] sm:$0xff] %v238
    $region33: #{tpu_custom_call.1} parent=1 // pred_fallthru
      _
    // Predicated region
    $region34: #{tpu_custom_call.1} parent=1 // pred_check
      _
    $region35: #{tpu_custom_call.1} parent=1 // pred_check_branch
      %241 = sbr.rel (0) target = $region37
    $region36: #{tpu_custom_call.1} parent=1 // pred_region
      %243 = vsyncadd [#allocation9], 0
      %s245 = sshll.u32 [#allocation13], 4
      %s246 = int_to_ptr.vmem [resolvable:$true] %s245
      %s247 = sshll.u32 %s3, 4
      %s248 = int_to_ptr.hbm [resolvable:$true] %s247
      %250 = dma.vmem_to_hbm [thread:$0]  %s246, 128, %s248, [#allocation9]
    $region37: #{tpu_custom_call.1} parent=1 // pred_fallthru
      _
    // Predicated region
    $region38: #{tpu_custom_call.1} parent=1 // pred_check
      _
    $region39: #{tpu_custom_call.1} parent=1 // pred_check_branch
      %252 = sbr.rel (0) target = $region41
    $region40: #{tpu_custom_call.1} parent=1 // pred_region
      %254 = vsyncadd [#allocation15], 0
      %s256 = sshll.u32 [#allocation14], 4
      %s257 = int_to_ptr.vmem [resolvable:$true] %s256
      %s258 = sshll.u32 %s4, 4
      %s259 = int_to_ptr.hbm [resolvable:$true] %s258
      %261 = dma.vmem_to_hbm [thread:$0]  %s257, 128, %s259, [#allocation15]
    $region41: #{tpu_custom_call.1} parent=1 // pred_fallthru
      _
    // Predicated region
    $region42: #{tpu_custom_call.1} parent=1 // pred_check
      _
    $region43: #{tpu_custom_call.1} parent=1 // pred_check_branch
      %263 = sbr.rel (0) target = $region45
    $region44: #{tpu_custom_call.1} parent=1 // pred_region
      %265 = dma.done [#allocation9], 128
    $region45: #{tpu_custom_call.1} parent=1 // pred_fallthru
      _
    // Predicated region
    $region46: #{tpu_custom_call.1} parent=1 // pred_check
      _
    $region47: #{tpu_custom_call.1} parent=1 // pred_check_branch
      %267 = sbr.rel (0) target = $region49
    $region48: #{tpu_custom_call.1} parent=1 // pred_region
      %269 = dma.done [#allocation15], 128
    $region49: #{tpu_custom_call.1} parent=1 // pred_fallthru
      _
    %270 = vsyncpa [#allocation8], 1
    %271 = vsyncpa [#allocation11], 1
    %272 = vsyncpa [#allocation9], 1
    %273 = vsyncpa [#allocation15], 1

</llo_original>
